<compile_context>
chip_gen: v7x
topology: tpu7x:2x2x1
jax: 0.10.0
libtpu: 0.0.40
codegen_flags: <defaults>
</compile_context>

<pallas_src>
import jax
import jax.numpy as jnp
from jax import lax
from jax.experimental import pallas as pl
from jax.experimental.pallas import tpu as pltpu

_LANE = 128


def _make_kernel(hw_true, tile_hw, chunk_w):
    """Build the kernel body for a given (static) spatial size / tiling."""
    needs_mask = (hw_true % tile_hw) != 0
    n_chunks = tile_hw // _LANE if chunk_w == _LANE else 0

    def kernel(x_ref, out_ref, max_part_ref, sum_acc_ref):
        k = pl.program_id(1)
        n_hw = pl.num_programs(1)

        # ---- init accumulators on the first spatial block -------------------
        @pl.when(k == 0)
        def _init():
            max_part_ref[...] = jnp.full_like(max_part_ref, -jnp.inf)
            sum_acc_ref[...] = jnp.zeros_like(sum_acc_ref)

        x = x_ref[...]  # (tile_nc, tile_hw), native dtype (no full-block upcast)

        if needs_mask:
            # Only the last H*W block is ragged; mask invalid lanes.
            rem = hw_true - k * tile_hw
            lane = lax.broadcasted_iota(jnp.int32, (1, tile_hw), 1)
            valid = lane < rem
            x_max = jnp.where(valid, x, -jnp.inf)   # neutral for max
            x_sum = jnp.where(valid, x, 0.0)        # neutral for sum
        else:
            x_max = x
            x_sum = x

        # ---- running max: VPU maximum over 128-lane chunks ------------------
        m = max_part_ref[...]
        if n_chunks:
            for c in range(n_chunks):  # static, fully unrolled
                m = jnp.maximum(
                    m, x_max[:, c * _LANE:(c + 1) * _LANE].astype(jnp.float32))
        else:
            # tile_hw not a multiple of 128 (only when the whole H*W fits one
            # block): fall back to a direct cross-lane max for this block.
            m = jnp.maximum(
                m, jnp.max(x_max, axis=-1, keepdims=True).astype(jnp.float32))
        max_part_ref[...] = m

        # ---- running sum on the MXU: dot with a ones column (f32 accum) -----
        ones = jnp.ones((tile_hw, 1), dtype=x.dtype)
        sum_acc_ref[...] += jnp.dot(x_sum, ones,
                                    preferred_element_type=jnp.float32)

        # ---- finalize on the last spatial block ------------------------------
        @pl.when(k == n_hw - 1)
        def _finalize():
            mx = jnp.max(max_part_ref[...], axis=-1, keepdims=True)
            mean = sum_acc_ref[...] * (1.0 / hw_true)  # divide by TRUE H*W
            out_ref[...] = jnp.concatenate([mx, mean], axis=-1).astype(out_ref.dtype)

    return kernel


def adaptive_concat_pool2d(x, *, target_block_bytes=2 * 1024 * 1024):
    """x: (N, C, H, W) -> (N, 2*C, 1, 1) = [max_pool || avg_pool] along channels."""
    N, C, H, W = x.shape
    NC = N * C
    HW = H * W
    x2d = x.reshape(NC, HW)

    # --- spatial (H*W) tiling: full row if small, else 128-aligned chunks ----
    max_tile_hw = 2048
    tile_hw = HW if HW <= max_tile_hw else max_tile_hw
    n_hw = pl.cdiv(HW, tile_hw)

    # --- N*C tiling: biggest multiple-of-8 tile keeping the block ~2 MiB -----
    itemsize = jnp.dtype(x.dtype).itemsize
    rows = max(8, target_block_bytes // (tile_hw * itemsize))
    rows = (int(rows) // 8) * 8
    rows = min(rows, 1024)          # bound lane-padded scratch footprint
    tile_nc = NC if rows >= NC else rows   # full-dim block is exempt from the 8-row rule
    n_nc = pl.cdiv(NC, tile_nc)

    chunk_w = _LANE if (tile_hw % _LANE == 0) else 1
    kernel = _make_kernel(HW, tile_hw, chunk_w)

    out = pl.pallas_call(
        kernel,
        out_shape=jax.ShapeDtypeStruct((NC, 2), x.dtype),
        grid_spec=pltpu.PrefetchScalarGridSpec(
            num_scalar_prefetch=0,
            grid=(n_nc, n_hw),                       # reduction axis last
            in_specs=[pl.BlockSpec((tile_nc, tile_hw), lambda i, k: (i, k))],
            out_specs=pl.BlockSpec((tile_nc, 2), lambda i, k: (i, 0)),
            scratch_shapes=[
                pltpu.VMEM((tile_nc, chunk_w), jnp.float32),  # running max partial
                pltpu.VMEM((tile_nc, 1), jnp.float32),        # running sum
            ],
        ),
        compiler_params=pltpu.CompilerParams(
            dimension_semantics=("parallel", "arbitrary"),
        ),
    )(x2d)

    max_out = out[:, 0].reshape(N, C, 1, 1)
    avg_out = out[:, 1].reshape(N, C, 1, 1)
    # torch.cat([self.mp(x), self.ap(x)], 1)
    return jnp.concatenate([max_out, avg_out], axis=1)


def _reference(x):
    ref_max = jnp.max(x, axis=(2, 3), keepdims=True)
    ref_avg = jnp.mean(x, axis=(2, 3), keepdims=True)
    return jnp.concatenate([ref_max, ref_avg], axis=1)


if __name__ == "__main__":
    key = jax.random.PRNGKey(0)

    # Test 1: base small shape (single block, chunked VPU max path).
    N, C, H, W = 2, 4, 16, 16
    x = jax.random.normal(key, (N, C, H, W), dtype=jnp.float32)
    out = jax.block_until_ready(adaptive_concat_pool2d(x))
    ref = _reference(x)
    assert out.shape == (N, 2 * C, 1, 1), out.shape
    assert jnp.allclose(out, ref, atol=1e-5, rtol=1e-5)

    # Test 2: exercises the H*W reduction grid axis + ragged-tail masking.
    k2 = jax.random.PRNGKey(1)
    x2 = jax.random.normal(k2, (2, 4, 48, 48), dtype=jnp.float32)  # HW=2304 > 2048
    out2 = jax.block_until_ready(adaptive_concat_pool2d(x2))
    ref2 = _reference(x2)
    assert jnp.allclose(out2, ref2, atol=1e-5, rtol=1e-5)

    # Test 3: exercises N*C tiling with a partial last row-block.
    k3 = jax.random.PRNGKey(2)
    x3 = jax.random.normal(k3, (2, 40, 16, 16), dtype=jnp.float32)  # NC=80
    out3 = jax.block_until_ready(
        adaptive_concat_pool2d(x3, target_block_bytes=64 * 1024))
    ref3 = _reference(x3)
    assert jnp.allclose(out3, ref3, atol=1e-5, rtol=1e-5)

    print("KERNEL_OK")
</pallas_src>

<mosaic_0001>
module attributes {stable_mosaic.version = 11 : i64} {
  func.func @kernel(%arg0: i32, %arg1: i32, %arg2: memref<8x256xf32, #tpu.memory_space<vmem>>, %arg3: memref<8x2xf32, #tpu.memory_space<vmem>>, %arg4: memref<8x128xf32, #tpu.memory_space<vmem>>, %arg5: memref<8x1xf32, #tpu.memory_space<vmem>>) attributes {dimension_semantics = [#tpu.dimension_semantics<parallel>, #tpu.dimension_semantics<arbitrary>], iteration_bounds = array<i64: 1, 1>, scalar_prefetch = 0 : i64, scratch_operands = 2 : i64, tpu.core_type = #tpu.core_type<tc>, window_params = [{transform_indices = @transform_0, window_bounds = array<i64: 8, 256>}, {transform_indices = @transform_1, window_bounds = array<i64: 8, 2>}]} {
    %c0_i32 = arith.constant 0 : i32
    %0 = arith.cmpi eq, %arg1, %c0_i32 : i32
    %1 = arith.extui %0 : i1 to i32
    %c0_i32_0 = arith.constant 0 : i32
    %2 = arith.cmpi ne, %1, %c0_i32_0 : i32
    scf.if %2 {
      %cst_13 = arith.constant 0xFF800000 : f32
      %18 = vector.broadcast %cst_13 : f32 to vector<8x128xf32>
      %c0_14 = arith.constant 0 : index
      %c0_15 = arith.constant 0 : index
      %19 = vector.load %arg4[%c0_14, %c0_15] : memref<8x128xf32, #tpu.memory_space<vmem>>, vector<8x128xf32>
      tpu.vector_store %arg4[%c0_14, %c0_15], %18 {strides = array<i32>} : memref<8x128xf32, #tpu.memory_space<vmem>>, vector<8x128xf32>,
      %cst_16 = arith.constant 0.000000e+00 : f32
      %20 = vector.broadcast %cst_16 : f32 to vector<8x1xf32>
      %c0_17 = arith.constant 0 : index
      %c0_18 = arith.constant 0 : index
      %21 = vector.load %arg5[%c0_17, %c0_18] : memref<8x1xf32, #tpu.memory_space<vmem>>, vector<8x1xf32>
      tpu.vector_store %arg5[%c0_17, %c0_18], %20 {strides = array<i32>} : memref<8x1xf32, #tpu.memory_space<vmem>>, vector<8x1xf32>,
    } else {
    }
    %c0 = arith.constant 0 : index
    %c0_1 = arith.constant 0 : index
    %3 = vector.load %arg2[%c0, %c0_1] : memref<8x256xf32, #tpu.memory_space<vmem>>, vector<8x256xf32>
    %c0_2 = arith.constant 0 : index
    %c0_3 = arith.constant 0 : index
    %4 = vector.load %arg4[%c0_2, %c0_3] : memref<8x128xf32, #tpu.memory_space<vmem>>, vector<8x128xf32>
    %5 = vector.extract_strided_slice %3 {offsets = [0, 0], sizes = [8, 128], strides = [1, 1]} : vector<8x256xf32> to vector<8x128xf32>
    %6 = arith.maximumf %4, %5 : vector<8x128xf32>
    %7 = vector.extract_strided_slice %3 {offsets = [0, 128], sizes = [8, 128], strides = [1, 1]} : vector<8x256xf32> to vector<8x128xf32>
    %8 = arith.maximumf %6, %7 : vector<8x128xf32>
    %c0_4 = arith.constant 0 : index
    %c0_5 = arith.constant 0 : index
    %9 = vector.load %arg4[%c0_4, %c0_5] : memref<8x128xf32, #tpu.memory_space<vmem>>, vector<8x128xf32>
    tpu.vector_store %arg4[%c0_4, %c0_5], %8 {strides = array<i32>} : memref<8x128xf32, #tpu.memory_space<vmem>>, vector<8x128xf32>,
    %cst = arith.constant 1.000000e+00 : f32
    %10 = vector.broadcast %cst : f32 to vector<256x1xf32>
    %c0_6 = arith.constant 0 : index
    %c0_7 = arith.constant 0 : index
    %11 = vector.load %arg5[%c0_6, %c0_7] : memref<8x1xf32, #tpu.memory_space<vmem>>, vector<8x1xf32>
    %cst_8 = arith.constant dense<0.000000e+00> : vector<8x1xf32>
    %12 = tpu.matmul %3, %10, %cst_8 {dimension_numbers = #tpu.dot_dimension_numbers<[1], [0], [0], [1], [0, 0, 1, 1], [], []>} : vector<8x256xf32>, vector<256x1xf32>, vector<8x1xf32> -> vector<8x1xf32>
    %13 = arith.addf %11, %12 : vector<8x1xf32>
    %c0_9 = arith.constant 0 : index
    %c0_10 = arith.constant 0 : index
    %14 = vector.load %arg5[%c0_9, %c0_10] : memref<8x1xf32, #tpu.memory_space<vmem>>, vector<8x1xf32>
    tpu.vector_store %arg5[%c0_9, %c0_10], %13 {strides = array<i32>} : memref<8x1xf32, #tpu.memory_space<vmem>>, vector<8x1xf32>,
    %c0_i32_11 = arith.constant 0 : i32
    %15 = arith.cmpi eq, %arg1, %c0_i32_11 : i32
    %16 = arith.extui %15 : i1 to i32
    %c0_i32_12 = arith.constant 0 : i32
    %17 = arith.cmpi ne, %16, %c0_i32_12 : i32
    scf.if %17 {
      %c0_13 = arith.constant 0 : index
      %c0_14 = arith.constant 0 : index
      %18 = vector.load %arg4[%c0_13, %c0_14] : memref<8x128xf32, #tpu.memory_space<vmem>>, vector<8x128xf32>
      %cst_15 = arith.constant dense<0xFF800000> : vector<8xf32>
      %19 = vector.multi_reduction <maximumf>, %18, %cst_15 [1] : vector<8x128xf32> to vector<8xf32>
      %20 = vector.shape_cast %19 : vector<8xf32> to vector<8x1xf32>
      %c0_16 = arith.constant 0 : index
      %c0_17 = arith.constant 0 : index
      %21 = vector.load %arg5[%c0_16, %c0_17] : memref<8x1xf32, #tpu.memory_space<vmem>>, vector<8x1xf32>
      %cst_18 = arith.constant 3.906250e-03 : f32
      %22 = vector.broadcast %cst_18 : f32 to vector<8x1xf32>
      %23 = arith.mulf %21, %22 : vector<8x1xf32>
      %24 = tpu.concatenate %20, %23 in 1 : vector<8x1xf32>, vector<8x1xf32> -> vector<8x2xf32>
      %c0_19 = arith.constant 0 : index
      %c0_20 = arith.constant 0 : index
      %25 = vector.load %arg3[%c0_19, %c0_20] : memref<8x2xf32, #tpu.memory_space<vmem>>, vector<8x2xf32>
      tpu.vector_store %arg3[%c0_19, %c0_20], %24 {strides = array<i32>} : memref<8x2xf32, #tpu.memory_space<vmem>>, vector<8x2xf32>,
    } else {
    }
    return
  }
  func.func @transform_0(%arg0: i32, %arg1: i32) -> (i32, i32) {
    %c0_i32 = arith.constant 0 : i32
    return %arg0, %arg1 : i32, i32
  }
  func.func @transform_1(%arg0: i32, %arg1: i32) -> (i32, i32) {
    %c0_i32 = arith.constant 0 : i32
    %c0_i32_0 = arith.constant 0 : i32
    return %arg0, %c0_i32 : i32, i32
  }
}

</mosaic_0001>

<llo_original>
// kernel: tpu_custom_call.1
$region0: #{tpu_custom_call.1}
  #allocation0 [shape = 'u32[]', space=smem, size = 0x4, offset = 0x4, fixed_abs, tag = 'smem constant byte address 0x4 - core index']
  #allocation1 [shape = 'u32[144,128]{1,0:T(1,128)}', space=vmem, size = 0x12000, scoped, tag = 'internal scratch']
  #allocation2 [shape = 'f32[8,128]{1,0:T(8,128)}', space=vmem, size = 0x1000, scoped, tag = 'scratch operand']
  #allocation3 [shape = 'f32[8,1]{1,0:T(8,128)}', space=vmem, size = 0x1000, scoped, tag = 'scratch operand']
  %s0 = inlined_call_operand.hbm [shape: f32[8,256], index: 0, kind: input, shape index: {}]
  %s1 = inlined_call_operand.vmem [shape: f32[8,2], index: 1, kind: output, shape index: {}]
  %s2 = sld [smem:[#allocation0]]
  $region26: #{tpu_custom_call.1} parent=0
    _
  %s4 = ssub.s32 1, %s2
  %s5 = scalar_select 0, %s4, %s2
  $region1: #{tpu_custom_call.1} parent=0
    #allocation4 [shape = 'u8[8192]{0}', space=vmem, size = 0x2000, scoped, tag = 'input window, operand 0, single buffered']
    #allocation5 [shape = 's32[1]{0}', space=sflag, size = 0x4, scoped, tag = 'scoped memory for tpu_custom_call.1']
    %6 = vsyncpa [#allocation5], 0
    // Predicated region
    $region2: #{tpu_custom_call.1} parent=1 // pred_check
      _
    $region3: #{tpu_custom_call.1} parent=1 // pred_check_branch
      %8 = sbr.rel (0) target = $region5
    $region4: #{tpu_custom_call.1} parent=1 // pred_region
      %s10 = ssub.s32 256, 256
      %11 = vsyncadd [#allocation5], %s10
      %s13 = sshll.u32 [#allocation4], 4
      %s14 = int_to_ptr.vmem [resolvable:$true] %s13
      %16 = dma.hbm_to_vmem [thread:$0]  %s0, 256, %s14, [#allocation5]
    $region5: #{tpu_custom_call.1} parent=1 // pred_fallthru
      _
    // Predicated region
    $region6: #{tpu_custom_call.1} parent=1 // pred_check
      _
    $region7: #{tpu_custom_call.1} parent=1 // pred_check_branch
      %18 = sbr.rel (0) target = $region9
    $region8: #{tpu_custom_call.1} parent=1 // pred_region
      %19 = dma.done [#allocation5], 256
    $region9: #{tpu_custom_call.1} parent=1 // pred_fallthru
      _
    %p20 = scmp.eq.s32.totalorder 0, 0
    // Predicated region
    $region10: #{tpu_custom_call.1} parent=1 // pred_check
      %p21 = pneg %p20
    $region11: #{tpu_custom_call.1} parent=1 // pred_check_branch
      %23 = sbr.rel (%p21) target = $region13
    $region12: #{tpu_custom_call.1} parent=1 // pred_region
      %24 = vst [vmem:[#allocation2] sm:$0xff] -inf
      %vm25 = vcmask 7168
      %26 = vst.msk [vmem:[#allocation3] sm:$0xff] %vm25, 0.0
    $region13: #{tpu_custom_call.1} parent=1 // pred_fallthru
      _
    %v27 = vld [vmem:[#allocation4] sm:$0xff]
    %v28 = vld [vmem:[#allocation4 + $0x8] sm:$0xff]
    %v29 = vld [vmem:[#allocation2] sm:$0xff]
    %v30 = vmax.f32 %v29, %v27
    %v31 = vmax.f32 %v30, %v28
    %32 = vst [vmem:[#allocation2] sm:$0xff] %v31
    %v33 = vld [vmem:[#allocation3] sm:$0xff]
    %34 = vmatprep.subr.mxu0 0.0
    %35 = vmatpush1.msra.mxu0 1.0
    %36 = vmatprep.subr.mxu0 0.0
    %37 = vmatpush1.msra.mxu0 1.0
    %38 = vmatprep.subr.mxu0 0.0
    %39 = vmatpush1.msra.mxu0 1.0
    %40 = vmatprep.subr.mxu0 0.0
    %41 = vmatpush1.msra.mxu0 1.0
    %42 = vmatprep.subr.mxu0 0.0
    %43 = vmatpush1.msra.mxu0 1.0
    %44 = vmatprep.subr.mxu0 0.0
    %45 = vmatpush1.msra.mxu0 1.0
    %46 = vmatprep.subr.mxu0 0.0
    %47 = vmatpush1.msra.mxu0 1.0
    %48 = vmatprep.subr.mxu0 0.0
    %49 = vmatpush1.msra.mxu0 1.0
    %50 = vmatprep.subr.mxu0 0.0
    %51 = vmatpush1.msra.mxu0 1.0
    %52 = vmatprep.subr.mxu0 0.0
    %53 = vmatpush1.msra.mxu0 1.0
    %54 = vmatprep.subr.mxu0 0.0
    %55 = vmatpush1.msra.mxu0 1.0
    %56 = vmatprep.subr.mxu0 0.0
    %57 = vmatpush1.msra.mxu0 1.0
    %58 = vmatprep.subr.mxu0 0.0
    %59 = vmatpush1.msra.mxu0 1.0
    %60 = vmatprep.subr.mxu0 0.0
    %61 = vmatpush1.msra.mxu0 1.0
    %62 = vmatprep.subr.mxu0 0.0
    %63 = vmatpush1.msra.mxu0 1.0
    %64 = vmatprep.subr.mxu0 0.0
    %65 = vmatpush1.msra.mxu0 1.0
    %66 = vmatprep.subr.mxu0 0.0
    %67 = vmatpush1.msra.mxu0 1.0
    %68 = vmatprep.subr.mxu0 0.0
    %69 = vmatpush1.msra.mxu0 1.0
    %70 = vmatprep.subr.mxu0 0.0
    %71 = vmatpush1.msra.mxu0 1.0
    %72 = vmatprep.subr.mxu0 0.0
    %73 = vmatpush1.msra.mxu0 1.0
    %74 = vmatprep.subr.mxu0 0.0
    %75 = vmatpush1.msra.mxu0 1.0
    %76 = vmatprep.subr.mxu0 0.0
    %77 = vmatpush1.msra.mxu0 1.0
    %78 = vmatprep.subr.mxu0 0.0
    %79 = vmatpush1.msra.mxu0 1.0
    %80 = vmatprep.subr.mxu0 0.0
    %81 = vmatpush1.msra.mxu0 1.0
    %82 = vmatprep.subr.mxu0 0.0
    %83 = vmatpush1.msra.mxu0 1.0
    %84 = vmatprep.subr.mxu0 0.0
    %85 = vmatpush1.msra.mxu0 1.0
    %86 = vmatprep.subr.mxu0 0.0
    %87 = vmatpush1.msra.mxu0 1.0
    %88 = vmatprep.subr.mxu0 0.0
    %89 = vmatpush1.msra.mxu0 1.0
    %90 = vmatprep.subr.mxu0 0.0
    %91 = vmatpush1.msra.mxu0 1.0
    %92 = vmatprep.subr.mxu0 0.0
    %93 = vmatpush1.msra.mxu0 1.0
    %94 = vmatprep.subr.mxu0 0.0
    %95 = vmatpush1.msra.mxu0 1.0
    %96 = vmatprep.subr.mxu0 0.0
    %97 = vmatpush1.msra.mxu0 1.0
    %98 = vmatprep.mubr.f32.mxu0 %v28
    %99 = vmatmul.mubr.f32.gmra.mrb[0].mxu0 %v27
    %v100 = vpop.f32.mrb[0].mxu0
    %v101 = vadd.f32 0.0, %v100
    %v102 = vpop.f32.mrb[0].mxu0
    %103 = vdwg.mxu0
    %v104 = vadd.f32 %v33, %v101
    %vm105 = vcmask 7168
    %106 = vst.msk [vmem:[#allocation3] sm:$0xff] %vm105, %v104
    // Predicated region
    $region14: #{tpu_custom_call.1} parent=1 // pred_check
      %p107 = pneg %p20
    $region15: #{tpu_custom_call.1} parent=1 // pred_check_branch
      %109 = sbr.rel (%p107) target = $region17
    $region16: #{tpu_custom_call.1} parent=1 // pred_region
      %v110 = vld [vmem:[#allocation2] sm:$0xff]
      %111 = vmax.xlane.f32.xlu0 %v110
      %v112 = vpop.xlane.xlu0 %111
      %v113 = vld [vmem:[#allocation3] sm:$0xff]
      %v114 = vmul.f32 %v113, 0.00390625
      %116 = vrot.lane.b32.xlu0 %v114, 1
      %v117 = vpop.permute.xlu0 %116
      %v119 = vsel %vm105, %v112, %v117
      %vm120 = vcmask 15360
      %121 = vst.msk [vmem:[%s1] sm:$0xff] %vm120, %v119
    $region17: #{tpu_custom_call.1} parent=1 // pred_fallthru
      _
    // Predicated region
    $region18: #{tpu_custom_call.1} parent=1 // pred_check
      _
    $region19: #{tpu_custom_call.1} parent=1 // pred_check_branch
      %123 = sbr.rel (0) target = $region21
    $region20: #{tpu_custom_call.1} parent=1 // pred_region
      _
    $region21: #{tpu_custom_call.1} parent=1 // pred_fallthru
      _
    // Predicated region
    $region22: #{tpu_custom_call.1} parent=1 // pred_check
      _
    $region23: #{tpu_custom_call.1} parent=1 // pred_check_branch
      %125 = sbr.rel (0) target = $region25
    $region24: #{tpu_custom_call.1} parent=1 // pred_region
      _
    $region25: #{tpu_custom_call.1} parent=1 // pred_fallthru
      _
    %126 = vsyncpa [#allocation5], 1

</llo_original>
